<compile_context>
chip_gen: v6e
topology: v6e:2x2x1
jax: 0.10.0
libtpu: 0.0.40
codegen_flags: <defaults>
</compile_context>

<pallas_src>
import functools
import math

import jax
import jax.numpy as jnp
from jax.experimental import pallas as pl
from jax.experimental.pallas import tpu as pltpu

MIN_NORM = 1e-15
PROJ_EPS = 4e-3       # HGCN PoincareBall eps for float32
ARTANH_CLIP = 1e-7    # float32-safe version of HGCN's (1 - 1e-15) clamp


# ---------- PoincareBall math (pure jnp, usable inside kernels) ----------
def _artanh(z):
    z = jnp.clip(z, -1.0 + ARTANH_CLIP, 1.0 - ARTANH_CLIP)
    return 0.5 * jnp.log((1.0 + z) / (1.0 - z))


def _logmap0(x, c):
    sqrt_c = jnp.sqrt(c)
    norm = jnp.maximum(jnp.sqrt(jnp.sum(x * x, axis=-1, keepdims=True)), MIN_NORM)
    return _artanh(sqrt_c * norm) / (sqrt_c * norm) * x


def _expmap0(u, c):
    sqrt_c = jnp.sqrt(c)
    norm = jnp.maximum(jnp.sqrt(jnp.sum(u * u, axis=-1, keepdims=True)), MIN_NORM)
    return jnp.tanh(sqrt_c * norm) * u / (sqrt_c * norm)


def _proj(x, c):
    sqrt_c = jnp.sqrt(c)
    norm = jnp.maximum(jnp.sqrt(jnp.sum(x * x, axis=-1, keepdims=True)), MIN_NORM)
    maxnorm = (1.0 - PROJ_EPS) / sqrt_c
    return jnp.where(norm > maxnorm, x / norm * maxnorm, x)


# ---------- Kernel 1 (prologue): logmap0 + stacked projection, once ----------
# Produces, for the row tile:
#   haug = [h_0 | 1 | h_1 | 1 | ...]   (N, H*(Fh+1)) bf16, lane-dense slab
#   f12  = [a1.h_i | a2.h_i]           (N, 2H) f32 attention score terms
def _prologue_kernel(x_ref, wcat_ref, haug_ref, f12_ref, *, c, n_heads, fh):
    x_t = _logmap0(x_ref[...], c)                                        # (TM, D)
    g = jnp.dot(x_t, wcat_ref[...], preferred_element_type=jnp.float32)  # (TM, H*Fh+2H)
    tm = x_ref.shape[0]
    ones = jnp.ones((tm, 1), jnp.float32)
    parts = []
    for h in range(n_heads):
        parts.append(g[:, h * fh:(h + 1) * fh])
        parts.append(ones)                       # ones column folds rowsum into MXU
    haug_ref[...] = jnp.concatenate(parts, axis=1).astype(haug_ref.dtype)
    f12_ref[...] = g[:, n_heads * fh:]


# ---------- Kernel 2: row-tiled sparse-GAT attention + fused epilogue ----------
def _attn_kernel(adj_ref, f1_ref, f2t_ref, haug_ref, out_ref, *attn_refs,
                 c, alpha, n_heads, fh, score_dtype, return_attn):
    adj = adj_ref[...]                                 # (TM, N) int8 edge mask
    f1 = f1_ref[...].astype(score_dtype)               # (TM, H) query-side term
    f2t = f2t_ref[...].astype(score_dtype)             # (H, N)  key-side term
    haug = haug_ref[...]                               # (N, H*(Fh+1)) bf16 rhs slab
    fw = fh + 1

    sup, rows = [], []
    for h in range(n_heads):                           # static unroll (H small)
        e = f1[:, h:h + 1] + f2t[h:h + 1, :]           # (TM, N) broadcast add
        # exp(-LeakyReLU(e, alpha)) == exp(-max(e, alpha*e)) for 0 < alpha < 1.
        s = jnp.exp(-jnp.maximum(e, alpha * e))
        s = jnp.where(adj != 0, s, 0.0).astype(jnp.bfloat16)   # dense edge_e
        rhs = haug[:, h * fw:(h + 1) * fw]             # (N, Fh+1) = [h_h | 1]
        num = jnp.dot(s, rhs, preferred_element_type=jnp.float32)   # (TM, Fh+1)
        rowsum = jnp.maximum(num[:, fh:fh + 1], MIN_NORM)   # guard isolated nodes
        h_prime = num[:, :fh] * pl.reciprocal(rowsum, approx=True)
        sup.append(jnp.where(h_prime > 0, h_prime, jnp.exp(h_prime) - 1.0))  # F.elu
        if return_attn:
            attn_refs[0][h] = s                        # dense edge_e (bf16 log tensor)
            rows.append(num[:, fh:fh + 1])

    support = jnp.concatenate(sup, axis=1)             # torch.cat(heads, dim=1)
    out_ref[...] = _proj(_expmap0(support, c), c)      # fused expmap0 + proj
    if return_attn:
        attn_refs[1][...] = jnp.concatenate(rows, axis=1)   # e_rowsum, single store


# ---------- host-side heuristics ----------
def _vmem_limit_bytes():
    cap = 64 << 20
    try:
        info = pltpu.get_tpu_info()
        cap = int(getattr(info, "vmem_capacity_bytes", cap))
    except Exception:
        pass
    # ~96 MiB on 128 MiB parts (v5e/v6e), ~48 MiB on v7x's 64 MiB.
    return min(cap * 3 // 4, 100 << 20)


def _score_compute_dtype():
    # bf16 VALU/EUP exist on v6e and later; keep f32 on v5e/v4 (cast only at dot).
    try:
        kind = jax.devices()[0].device_kind.lower()
    except Exception:
        return jnp.float32
    if "v6" in kind or "v7" in kind:
        return jnp.bfloat16
    return jnp.float32


def _choose_row_tile(n, h, fh, return_attn, budget):
    """Largest row tile dividing n within the VMEM budget, keeping >=4 grid steps."""
    if n % 128 != 0:
        return n                                     # small/odd graphs: one full tile
    lane = lambda d: -(-d // 128) * 128              # lane padding of last VMEM dim
    sub = lambda d: -(-d // 8) * 8                   # sublane padding
    f = h * fh
    # grid-invariant inputs (single-buffered): bf16 rhs slab + f32 key scores
    resident = 2 * n * lane(h * (fh + 1)) + 4 * sub(h) * lane(n)
    # streaming, double-buffered per row of the tile
    per_row = 2 * (1 * n + 4 * lane(h) + 4 * lane(f))      # adj int8 + f1 + out
    if return_attn:
        per_row += 2 * (2 * h * n + 4 * lane(h))            # bf16 attn tile + rowsum
    cap = (budget - resident) // max(per_row, 1)
    tm = 128
    while tm > 8 and tm > cap and n % (tm // 2) == 0:        # huge-N safety shrink
        tm //= 2
    while tm * 2 <= cap and n % (tm * 2) == 0 and n // (tm * 2) >= 4:
        tm *= 2                                              # keep >=4 steps (megacore)
    return tm


def hyp_attn_agg(x, adj, w_heads, a1_heads, a2t_heads, *, c=1.0, alpha=0.2,
                 return_attn=False):
    N, D = x.shape
    H, _, Fh = w_heads.shape
    F = H * Fh
    fw = Fh + 1

    # Fold per-head projections into one stacked weight (tiny host-side ops):
    #   wcat = [W_0 | ... | W_{H-1} | W_h@a1_h (H cols) | W_h@a2_h (H cols)]
    w_stacked = jnp.transpose(w_heads, (1, 0, 2)).reshape(D, F)
    wa1 = jnp.einsum('hdf,hf->dh', w_heads, a1_heads[:, :, 0])
    wa2 = jnp.einsum('hdf,hf->dh', w_heads, a2t_heads[:, 0, :])
    wcat = jnp.concatenate([w_stacked, wa1, wa2], axis=1).astype(jnp.float32)
    wtot = F + 2 * H

    vmem_limit = _vmem_limit_bytes()
    budget = max(vmem_limit - (8 << 20), 16 << 20)
    tm = _choose_row_tile(N, H, Fh, return_attn, budget)
    grid = (N // tm,)
    score_dtype = _score_compute_dtype()

    # adj is the dominant HBM stream: keep it int8 (pass int8/bool to avoid this cast).
    adj_i8 = adj if adj.dtype == jnp.int8 else (adj != 0).astype(jnp.int8)

    # ---- prologue: logmap0 once + one stacked matmul, lane-dense outputs ----
    haug, f12 = pl.pallas_call(
        functools.partial(_prologue_kernel, c=c, n_heads=H, fh=Fh),
        grid=grid,
        in_specs=[
            pl.BlockSpec((tm, D), lambda i: (i, 0)),
            pl.BlockSpec((D, wtot), lambda i: (0, 0)),
        ],
        out_specs=[
            pl.BlockSpec((tm, H * fw), lambda i: (i, 0)),
            pl.BlockSpec((tm, 2 * H), lambda i: (i, 0)),
        ],
        out_shape=[
            jax.ShapeDtypeStruct((N, H * fw), jnp.bfloat16),
            jax.ShapeDtypeStruct((N, 2 * H), jnp.float32),
        ],
        compiler_params=pltpu.CompilerParams(
            dimension_semantics=("parallel",),
            vmem_limit_bytes=vmem_limit,
        ),
    )(x.astype(jnp.float32), wcat)

    f1 = f12[:, :H]                      # (N, H)  query-side score term
    # TODO(synk): this transpose is only N*H elements (negligible vs the N^2 adj
    # stream); kept host-side to avoid a narrow (tm,H)->(H,tm) in-kernel relayout.
    f2t = jnp.transpose(f12[:, H:])      # (H, N)  key-side score term (lanes = keys)

    bytes_accessed = N * N + 2 * N * H * fw + 4 * N * 2 * H + 4 * N * F
    if return_attn:
        bytes_accessed += 2 * H * N * N + 4 * N * H

    def call_attention(single_buffer):
        # grid-invariant inputs: constant index_map -> request single buffering
        kw = {"pipeline_mode": pl.Buffered(1)} if single_buffer else {}
        in_specs = [
            pl.BlockSpec((tm, N), lambda i: (i, 0)),            # adj row tile (int8)
            pl.BlockSpec((tm, H), lambda i: (i, 0)),            # f1
            pl.BlockSpec((H, N), lambda i: (0, 0), **kw),       # f2t (full, lane dense)
            pl.BlockSpec((N, H * fw), lambda i: (0, 0), **kw),  # [h|1] slab (full)
        ]
        out_specs = [pl.BlockSpec((tm, F), lambda i: (i, 0))]
        out_shape = [jax.ShapeDtypeStruct((N, F), jnp.float32)]
        if return_attn:
            out_specs += [
                pl.BlockSpec((H, tm, N), lambda i: (0, i, 0)),
                pl.BlockSpec((tm, H), lambda i: (i, 0)),
            ]
            out_shape += [
                jax.ShapeDtypeStruct((H, N, N), jnp.bfloat16),   # log-only: bf16
                jax.ShapeDtypeStruct((N, H), jnp.float32),
            ]
        return pl.pallas_call(
            functools.partial(_attn_kernel, c=c, alpha=alpha, n_heads=H, fh=Fh,
                              score_dtype=score_dtype, return_attn=return_attn),
            grid=grid,
            in_specs=in_specs,
            out_specs=out_specs,
            out_shape=out_shape,
            compiler_params=pltpu.CompilerParams(
                dimension_semantics=("parallel",),
                vmem_limit_bytes=vmem_limit,
            ),
            cost_estimate=pl.CostEstimate(
                flops=2 * H * N * N * fw,
                transcendentals=H * N * N,
                bytes_accessed=bytes_accessed,
            ),
        )(adj_i8, f1, f2t, haug)

    try:
        results = call_attention(True)
    except Exception:
        # pipeline_mode=pl.Buffered(1) unavailable on this jax version: default buffering.
        results = call_attention(False)

    if return_attn:
        output, attn, rowsum = results
        # adj_att analogue of the torch code: dense edge_e per head + e_rowsum
        return output, (attn, rowsum)
    return results[0]


if __name__ == "__main__":
    key = jax.random.PRNGKey(0)
    N, D, H = 128, 32, 2          # nodes (padded to 128 lanes), in_features, n_heads
    Fh = D // H
    c_val, alpha = 1.0, 0.2

    k1, k2, k3, k4 = jax.random.split(key, 4)

    # hyperbolic input points: expmap0 of small tangent vectors (inside the ball)
    x = _expmap0(0.1 * jax.random.normal(k1, (N, D), jnp.float32), c_val)

    # adjacency structure as dense 0/1 mask; self-loops keep every row non-empty
    adj = jax.random.bernoulli(k2, 0.15, (N, N)).astype(jnp.float32)
    adj = jnp.maximum(adj, jnp.eye(N, dtype=jnp.float32))

    # SpAttn parameters, xavier_normal_ with gain=1.414 (deterministic, in-script)
    w_std = 1.414 * math.sqrt(2.0 / (D + Fh))
    a_std = 1.414 * math.sqrt(2.0 / (2 * Fh + 1))
    w_heads = w_std * jax.random.normal(k3, (H, D, Fh), jnp.float32)
    a_heads = a_std * jax.random.normal(k4, (H, 1, 2 * Fh), jnp.float32)
    a1_heads = jnp.transpose(a_heads[:, :, :Fh], (0, 2, 1))   # (H, Fh, 1) for h_i
    a2t_heads = a_heads[:, :, Fh:]                             # (H, 1, Fh) for h_j

    # fast path (no dense attention writeback)
    out = hyp_attn_agg(x, adj, w_heads, a1_heads, a2t_heads, c=c_val, alpha=alpha)
    jax.block_until_ready(out)

    # attention-returning path (torch module's adj_att analogue)
    out2, (attn, rowsum) = hyp_attn_agg(x, adj, w_heads, a1_heads, a2t_heads,
                                        c=c_val, alpha=alpha, return_attn=True)
    jax.block_until_ready(out2)

    # pure-JAX reference check
    x_t = _logmap0(x, c_val)
    heads, attn_ref_l, rs_ref_l = [], [], []
    for hh in range(H):
        hf = x_t @ w_heads[hh]
        e = hf @ a1_heads[hh] + a2t_heads[hh] @ hf.T
        s = jnp.exp(-jnp.where(e > 0, e, alpha * e)) * adj
        rs = jnp.sum(s, axis=-1, keepdims=True)
        heads.append(jax.nn.elu((s @ hf) / rs))
        attn_ref_l.append(s)
        rs_ref_l.append(rs)
    ref = _proj(_expmap0(jnp.concatenate(heads, axis=1), c_val), c_val)

    assert jnp.allclose(out, ref, rtol=2e-2, atol=2e-2), "output mismatch (fast path)"
    assert jnp.allclose(out2, ref, rtol=2e-2, atol=2e-2), "output mismatch (attn path)"
    assert jnp.allclose(attn.astype(jnp.float32), jnp.stack(attn_ref_l),
                        rtol=2e-2, atol=2e-2), "edge_e mismatch"
    assert jnp.allclose(rowsum, jnp.concatenate(rs_ref_l, axis=1),
                        rtol=2e-2, atol=2e-2), "e_rowsum mismatch"

    print("KERNEL_OK")
</pallas_src>

<mosaic_0001>
module attributes {stable_mosaic.version = 11 : i64} {
  func.func @_prologue_kernel(%arg0: i32, %arg1: memref<128x32xf32, #tpu.memory_space<vmem>>, %arg2: memref<32x36xf32, #tpu.memory_space<vmem>>, %arg3: memref<128x34xbf16, #tpu.memory_space<vmem>>, %arg4: memref<128x4xf32, #tpu.memory_space<vmem>>) attributes {dimension_semantics = [#tpu.dimension_semantics<parallel>], iteration_bounds = array<i64: 1>, scalar_prefetch = 0 : i64, scratch_operands = 0 : i64, tpu.core_type = #tpu.core_type<tc>, window_params = [{transform_indices = @transform_0, window_bounds = array<i64: 128, 32>}, {pipeline_mode = #tpu.pipeline_mode<synchronous>, transform_indices = @transform_1, window_bounds = array<i64: 32, 36>}, {transform_indices = @transform_2, window_bounds = array<i64: 128, 34>}, {transform_indices = @transform_3, window_bounds = array<i64: 128, 4>}]} {
    %c0 = arith.constant 0 : index
    %c0_0 = arith.constant 0 : index
    %0 = vector.load %arg1[%c0, %c0_0] : memref<128x32xf32, #tpu.memory_space<vmem>>, vector<128x32xf32>
    %cst = arith.constant 1.000000e+00 : f32
    %1 = math.sqrt %cst : f32
    %2 = arith.mulf %0, %0 : vector<128x32xf32>
    %cst_1 = arith.constant dense<0.000000e+00> : vector<128xf32>
    %3 = vector.multi_reduction <add>, %2, %cst_1 [1] : vector<128x32xf32> to vector<128xf32>
    %4 = vector.shape_cast %3 : vector<128xf32> to vector<128x1xf32>
    %5 = math.sqrt %4 : vector<128x1xf32>
    %cst_2 = arith.constant 1.000000e-15 : f32
    %6 = vector.broadcast %cst_2 : f32 to vector<128x1xf32>
    %7 = arith.maximumf %5, %6 : vector<128x1xf32>
    %8 = vector.broadcast %1 : f32 to vector<128x1xf32>
    %9 = arith.mulf %8, %7 : vector<128x1xf32>
    %cst_3 = arith.constant -0.99999988 : f32
    %cst_4 = arith.constant 0.99999988 : f32
    %10 = vector.broadcast %cst_3 : f32 to vector<128x1xf32>
    %11 = arith.maximumf %10, %9 : vector<128x1xf32>
    %12 = vector.broadcast %cst_4 : f32 to vector<128x1xf32>
    %13 = arith.minimumf %12, %11 : vector<128x1xf32>
    %cst_5 = arith.constant 1.000000e+00 : f32
    %14 = vector.broadcast %cst_5 : f32 to vector<128x1xf32>
    %15 = arith.addf %14, %13 : vector<128x1xf32>
    %cst_6 = arith.constant 1.000000e+00 : f32
    %16 = vector.broadcast %cst_6 : f32 to vector<128x1xf32>
    %17 = arith.subf %16, %13 : vector<128x1xf32>
    %18 = arith.divf %15, %17 : vector<128x1xf32>
    %19 = math.log %18 : vector<128x1xf32>
    %cst_7 = arith.constant 5.000000e-01 : f32
    %20 = vector.broadcast %cst_7 : f32 to vector<128x1xf32>
    %21 = arith.mulf %20, %19 : vector<128x1xf32>
    %22 = vector.broadcast %1 : f32 to vector<128x1xf32>
    %23 = arith.mulf %22, %7 : vector<128x1xf32>
    %24 = arith.divf %21, %23 : vector<128x1xf32>
    %25 = vector.broadcast %24 : vector<128x1xf32> to vector<128x32xf32>
    %26 = arith.mulf %25, %0 : vector<128x32xf32>
    %c0_8 = arith.constant 0 : index
    %c0_9 = arith.constant 0 : index
    %27 = vector.load %arg2[%c0_8, %c0_9] : memref<32x36xf32, #tpu.memory_space<vmem>>, vector<32x36xf32>
    %cst_10 = arith.constant dense<0.000000e+00> : vector<128x36xf32>
    %28 = tpu.matmul %26, %27, %cst_10 {dimension_numbers = #tpu.dot_dimension_numbers<[1], [0], [0], [1], [0, 0, 1, 1], [], []>} : vector<128x32xf32>, vector<32x36xf32>, vector<128x36xf32> -> vector<128x36xf32>
    %cst_11 = arith.constant 1.000000e+00 : f32
    %29 = vector.broadcast %cst_11 : f32 to vector<128x1xf32>
    %30 = vector.extract_strided_slice %28 {offsets = [0, 0], sizes = [128, 16], strides = [1, 1]} : vector<128x36xf32> to vector<128x16xf32>
    %31 = vector.extract_strided_slice %28 {offsets = [0, 16], sizes = [128, 16], strides = [1, 1]} : vector<128x36xf32> to vector<128x16xf32>
    %32 = tpu.concatenate %30, %29, %31, %29 in 1 : vector<128x16xf32>, vector<128x1xf32>, vector<128x16xf32>, vector<128x1xf32> -> vector<128x34xf32>
    %33 = arith.truncf %32 : vector<128x34xf32> to vector<128x34xbf16>
    %c0_12 = arith.constant 0 : index
    %c0_13 = arith.constant 0 : index
    %34 = vector.load %arg3[%c0_12, %c0_13] : memref<128x34xbf16, #tpu.memory_space<vmem>>, vector<128x34xbf16>
    tpu.vector_store %arg3[%c0_12, %c0_13], %33 {strides = array<i32>} : memref<128x34xbf16, #tpu.memory_space<vmem>>, vector<128x34xbf16>,
    %35 = vector.extract_strided_slice %28 {offsets = [0, 32], sizes = [128, 4], strides = [1, 1]} : vector<128x36xf32> to vector<128x4xf32>
    %c0_14 = arith.constant 0 : index
    %c0_15 = arith.constant 0 : index
    %36 = vector.load %arg4[%c0_14, %c0_15] : memref<128x4xf32, #tpu.memory_space<vmem>>, vector<128x4xf32>
    tpu.vector_store %arg4[%c0_14, %c0_15], %35 {strides = array<i32>} : memref<128x4xf32, #tpu.memory_space<vmem>>, vector<128x4xf32>,
    return
  }
  func.func @transform_0(%arg0: i32) -> (i32, i32) {
    %c0_i32 = arith.constant 0 : i32
    %c0_i32_0 = arith.constant 0 : i32
    return %arg0, %c0_i32 : i32, i32
  }
  func.func @transform_1(%arg0: i32) -> (i32, i32) {
    %c0_i32 = arith.constant 0 : i32
    %c0_i32_0 = arith.constant 0 : i32
    %c0_i32_1 = arith.constant 0 : i32
    return %c0_i32, %c0_i32_0 : i32, i32
  }
  func.func @transform_2(%arg0: i32) -> (i32, i32) {
    %c0_i32 = arith.constant 0 : i32
    %c0_i32_0 = arith.constant 0 : i32
    return %arg0, %c0_i32 : i32, i32
  }
  func.func @transform_3(%arg0: i32) -> (i32, i32) {
    %c0_i32 = arith.constant 0 : i32
    %c0_i32_0 = arith.constant 0 : i32
    return %arg0, %c0_i32 : i32, i32
  }
}

</mosaic_0001>

<llo_original>
// kernel: tpu_custom_call.1
$region0: #{tpu_custom_call.1}
  #allocation0 [shape = 'u32[]', space=smem, size = 0x4, offset = 0x4, fixed_abs, tag = 'smem constant byte address 0x4 - core index']
  #allocation1 [shape = 'u32[144,128]{1,0:T(1,128)}', space=vmem, size = 0x12000, scoped, tag = 'internal scratch']
  %s0 = inlined_call_operand.vmem [shape: f32[128,32], index: 0, kind: input, shape index: {}]
  %s1 = inlined_call_operand.vmem [shape: f32[32,36], index: 1, kind: input, shape index: {}]
  %s2 = inlined_call_operand.vmem [shape: bf16[128,34], index: 2, kind: output, shape index: {0}]
  %s3 = inlined_call_operand.vmem [shape: f32[128,4], index: 3, kind: output, shape index: {1}]
  %4 = xla_tuple %s2, %s3
  %s5 = sld [smem:[#allocation0]]
  $region26: #{tpu_custom_call.1} parent=0
    _
  %s7 = ssub.s32 1, %s5
  %s8 = scalar_select 0, %s7, %s5
  // Predicated region
  $region2: #{tpu_custom_call.1} parent=0 // pred_check
    _
  $region3: #{tpu_custom_call.1} parent=0 // pred_check_branch
    %10 = sbr.rel (0) target = $region5
  $region4: #{tpu_custom_call.1} parent=0 // pred_region
    _
  $region5: #{tpu_custom_call.1} parent=0 // pred_fallthru
    _
  // Predicated region
  $region6: #{tpu_custom_call.1} parent=0 // pred_check
    _
  $region7: #{tpu_custom_call.1} parent=0 // pred_check_branch
    %12 = sbr.rel (0) target = $region9
  $region8: #{tpu_custom_call.1} parent=0 // pred_region
    _
  $region9: #{tpu_custom_call.1} parent=0 // pred_fallthru
    _
  %v13 = vld [vmem:[%s0] sm:$0xff]
  %v14 = vld [vmem:[%s0 + $0x8] sm:$0xff]
  %v15 = vld [vmem:[%s0 + $0x10] sm:$0xff]
  %v16 = vld [vmem:[%s0 + $0x18] sm:$0xff]
  %v17 = vld [vmem:[%s0 + $0x20] sm:$0xff]
  %v18 = vld [vmem:[%s0 + $0x28] sm:$0xff]
  %v19 = vld [vmem:[%s0 + $0x30] sm:$0xff]
  %v20 = vld [vmem:[%s0 + $0x38] sm:$0xff]
  %v21 = vld [vmem:[%s0 + $0x40] sm:$0xff]
  %v22 = vld [vmem:[%s0 + $0x48] sm:$0xff]
  %v23 = vld [vmem:[%s0 + $0x50] sm:$0xff]
  %v24 = vld [vmem:[%s0 + $0x58] sm:$0xff]
  %v25 = vld [vmem:[%s0 + $0x60] sm:$0xff]
  %v26 = vld [vmem:[%s0 + $0x68] sm:$0xff]
  %v27 = vld [vmem:[%s0 + $0x70] sm:$0xff]
  %v28 = vld [vmem:[%s0 + $0x78] sm:$0xff]
  %v29 = vmul.f32 %v13, %v13
  %v30 = vmul.f32 %v14, %v14
  %v31 = vmul.f32 %v15, %v15
  %v32 = vmul.f32 %v16, %v16
  %v33 = vmul.f32 %v17, %v17
  %v34 = vmul.f32 %v18, %v18
  %v35 = vmul.f32 %v19, %v19
  %v36 = vmul.f32 %v20, %v20
  %v37 = vmul.f32 %v21, %v21
  %v38 = vmul.f32 %v22, %v22
  %v39 = vmul.f32 %v23, %v23
  %v40 = vmul.f32 %v24, %v24
  %v41 = vmul.f32 %v25, %v25
  %v42 = vmul.f32 %v26, %v26
  %v43 = vmul.f32 %v27, %v27
  %v44 = vmul.f32 %v28, %v28
  %vm45 = vcmask 261120
  %v46 = vsel %vm45, %v29, 0.0
  %47 = vadd.xlane.f32.xlu0 %v46
  %v48 = vpop.xlane.xlu0 %47
  %v49 = vsel %vm45, %v30, 0.0
  %50 = vadd.xlane.f32.xlu0 %v49
  %v51 = vpop.xlane.xlu0 %50
  %v52 = vsel %vm45, %v31, 0.0
  %53 = vadd.xlane.f32.xlu0 %v52
  %v54 = vpop.xlane.xlu0 %53
  %v55 = vsel %vm45, %v32, 0.0
  %56 = vadd.xlane.f32.xlu0 %v55
  %v57 = vpop.xlane.xlu0 %56
  %v58 = vsel %vm45, %v33, 0.0
  %59 = vadd.xlane.f32.xlu0 %v58
  %v60 = vpop.xlane.xlu0 %59
  %v61 = vsel %vm45, %v34, 0.0
  %62 = vadd.xlane.f32.xlu0 %v61
  %v63 = vpop.xlane.xlu0 %62
  %v64 = vsel %vm45, %v35, 0.0
  %65 = vadd.xlane.f32.xlu0 %v64
  %v66 = vpop.xlane.xlu0 %65
  %v67 = vsel %vm45, %v36, 0.0
  %68 = vadd.xlane.f32.xlu0 %v67
  %v69 = vpop.xlane.xlu0 %68
  %v70 = vsel %vm45, %v37, 0.0
  %71 = vadd.xlane.f32.xlu0 %v70
  %v72 = vpop.xlane.xlu0 %71
  %v73 = vsel %vm45, %v38, 0.0
  %74 = vadd.xlane.f32.xlu0 %v73
  %v75 = vpop.xlane.xlu0 %74
  %v76 = vsel %vm45, %v39, 0.0
  %77 = vadd.xlane.f32.xlu0 %v76
  %v78 = vpop.xlane.xlu0 %77
  %v79 = vsel %vm45, %v40, 0.0
  %80 = vadd.xlane.f32.xlu0 %v79
  %v81 = vpop.xlane.xlu0 %80
  %v82 = vsel %vm45, %v41, 0.0
  %83 = vadd.xlane.f32.xlu0 %v82
  %v84 = vpop.xlane.xlu0 %83
  %v85 = vsel %vm45, %v42, 0.0
  %86 = vadd.xlane.f32.xlu0 %v85
  %v87 = vpop.xlane.xlu0 %86
  %v88 = vsel %vm45, %v43, 0.0
  %89 = vadd.xlane.f32.xlu0 %v88
  %v90 = vpop.xlane.xlu0 %89
  %v91 = vsel %vm45, %v44, 0.0
  %92 = vadd.xlane.f32.xlu0 %v91
  %v93 = vpop.xlane.xlu0 %92
  %v94 = vrsqrt.pop %v48
  %v95 = vmul.f32 %v48, %v94
  %vm96 = vcmp.eq.f32.partialorder %v48, inf
  %v97 = vsel %vm96, %v48, %v95
  %vm98 = vcmp.eq.f32.partialorder %v48, 0.0
  %v99 = vand.u32 %v48, 2147483648
  %v100 = vsel %vm98, %v99, %v97
  %v101 = vrsqrt.pop %v51
  %v102 = vmul.f32 %v51, %v101
  %vm103 = vcmp.eq.f32.partialorder %v51, inf
  %v104 = vsel %vm103, %v51, %v102
  %vm105 = vcmp.eq.f32.partialorder %v51, 0.0
  %v106 = vand.u32 %v51, 2147483648
  %v107 = vsel %vm105, %v106, %v104
  %v108 = vrsqrt.pop %v54
  %v109 = vmul.f32 %v54, %v108
  %vm110 = vcmp.eq.f32.partialorder %v54, inf
  %v111 = vsel %vm110, %v54, %v109
  %vm112 = vcmp.eq.f32.partialorder %v54, 0.0
  %v113 = vand.u32 %v54, 2147483648
  %v114 = vsel %vm112, %v113, %v111
  %v115 = vrsqrt.pop %v57
  %v116 = vmul.f32 %v57, %v115
  %vm117 = vcmp.eq.f32.partialorder %v57, inf
  %v118 = vsel %vm117, %v57, %v116
  %vm119 = vcmp.eq.f32.partialorder %v57, 0.0
  %v120 = vand.u32 %v57, 2147483648
  %v121 = vsel %vm119, %v120, %v118
  %v122 = vrsqrt.pop %v60
  %v123 = vmul.f32 %v60, %v122
  %vm124 = vcmp.eq.f32.partialorder %v60, inf
  %v125 = vsel %vm124, %v60, %v123
  %vm126 = vcmp.eq.f32.partialorder %v60, 0.0
  %v127 = vand.u32 %v60, 2147483648
  %v128 = vsel %vm126, %v127, %v125
  %v129 = vrsqrt.pop %v63
  %v130 = vmul.f32 %v63, %v129
  %vm131 = vcmp.eq.f32.partialorder %v63, inf
  %v132 = vsel %vm131, %v63, %v130
  %vm133 = vcmp.eq.f32.partialorder %v63, 0.0
  %v134 = vand.u32 %v63, 2147483648
  %v135 = vsel %vm133, %v134, %v132
  %v136 = vrsqrt.pop %v66
  %v137 = vmul.f32 %v66, %v136
  %vm138 = vcmp.eq.f32.partialorder %v66, inf
  %v139 = vsel %vm138, %v66, %v137
  %vm140 = vcmp.eq.f32.partialorder %v66, 0.0
  %v141 = vand.u32 %v66, 2147483648
  %v142 = vsel %vm140, %v141, %v139
  %v143 = vrsqrt.pop %v69
  %v144 = vmul.f32 %v69, %v143
  %vm145 = vcmp.eq.f32.partialorder %v69, inf
  %v146 = vsel %vm145, %v69, %v144
  %vm147 = vcmp.eq.f32.partialorder %v69, 0.0
  %v148 = vand.u32 %v69, 2147483648
  %v149 = vsel %vm147, %v148, %v146
  %v150 = vrsqrt.pop %v72
  %v151 = vmul.f32 %v72, %v150
  %vm152 = vcmp.eq.f32.partialorder %v72, inf
  %v153 = vsel %vm152, %v72, %v151
  %vm154 = vcmp.eq.f32.partialorder %v72, 0.0
  %v155 = vand.u32 %v72, 2147483648
  %v156 = vsel %vm154, %v155, %v153
  %v157 = vrsqrt.pop %v75
  %v158 = vmul.f32 %v75, %v157
  %vm159 = vcmp.eq.f32.partialorder %v75, inf
  %v160 = vsel %vm159, %v75, %v158
  %vm161 = vcmp.eq.f32.partialorder %v75, 0.0
  %v162 = vand.u32 %v75, 2147483648
  %v163 = vsel %vm161, %v162, %v160
  %v164 = vrsqrt.pop %v78
  %v165 = vmul.f32 %v78, %v164
  %vm166 = vcmp.eq.f32.partialorder %v78, inf
  %v167 = vsel %vm166, %v78, %v165
  %vm168 = vcmp.eq.f32.partialorder %v78, 0.0
  %v169 = vand.u32 %v78, 2147483648
  %v170 = vsel %vm168, %v169, %v167
  %v171 = vrsqrt.pop %v81
  %v172 = vmul.f32 %v81, %v171
  %vm173 = vcmp.eq.f32.partialorder %v81, inf
  %v174 = vsel %vm173, %v81, %v172
  %vm175 = vcmp.eq.f32.partialorder %v81, 0.0
  %v176 = vand.u32 %v81, 2147483648
  %v177 = vsel %vm175, %v176, %v174
  %v178 = vrsqrt.pop %v84
  %v179 = vmul.f32 %v84, %v178
  %vm180 = vcmp.eq.f32.partialorder %v84, inf
  %v181 = vsel %vm180, %v84, %v179
  %vm182 = vcmp.eq.f32.partialorder %v84, 0.0
  %v183 = vand.u32 %v84, 2147483648
  %v184 = vsel %vm182, %v183, %v181
  %v185 = vrsqrt.pop %v87
  %v186 = vmul.f32 %v87, %v185
  %vm187 = vcmp.eq.f32.partialorder %v87, inf
  %v188 = vsel %vm187, %v87, %v186
  %vm189 = vcmp.eq.f32.partialorder %v87, 0.0
  %v190 = vand.u32 %v87, 2147483648
  %v191 = vsel %vm189, %v190, %v188
  %v192 = vrsqrt.pop %v90
  %v193 = vmul.f32 %v90, %v192
  %vm194 = vcmp.eq.f32.partialorder %v90, inf
  %v195 = vsel %vm194, %v90, %v193
  %vm196 = vcmp.eq.f32.partialorder %v90, 0.0
  %v197 = vand.u32 %v90, 2147483648
  %v198 = vsel %vm196, %v197, %v195
  %v199 = vrsqrt.pop %v93
  %v200 = vmul.f32 %v93, %v199
  %vm201 = vcmp.eq.f32.partialorder %v93, inf
  %v202 = vsel %vm201, %v93, %v200
  %vm203 = vcmp.eq.f32.partialorder %v93, 0.0
  %v204 = vand.u32 %v93, 2147483648
  %v205 = vsel %vm203, %v204, %v202
  %v206 = vmax.f32 %v100, 1e-15
  %v207 = vmax.f32 %v107, 1e-15
  %v208 = vmax.f32 %v114, 1e-15
  %v209 = vmax.f32 %v121, 1e-15
  %v210 = vmax.f32 %v128, 1e-15
  %v211 = vmax.f32 %v135, 1e-15
  %v212 = vmax.f32 %v142, 1e-15
  %v213 = vmax.f32 %v149, 1e-15
  %v214 = vmax.f32 %v156, 1e-15
  %v215 = vmax.f32 %v163, 1e-15
  %v216 = vmax.f32 %v170, 1e-15
  %v217 = vmax.f32 %v177, 1e-15
  %v218 = vmax.f32 %v184, 1e-15
  %v219 = vmax.f32 %v191, 1e-15
  %v220 = vmax.f32 %v198, 1e-15
  %v221 = vmax.f32 %v205, 1e-15
  %v222 = vmax.f32 %v206, -0.9999999
  %v223 = vmax.f32 %v207, -0.9999999
  %v224 = vmax.f32 %v208, -0.9999999
  %v225 = vmax.f32 %v209, -0.9999999
  %v226 = vmax.f32 %v210, -0.9999999
  %v227 = vmax.f32 %v211, -0.9999999
  %v228 = vmax.f32 %v212, -0.9999999
  %v229 = vmax.f32 %v213, -0.9999999
  %v230 = vmax.f32 %v214, -0.9999999
  %v231 = vmax.f32 %v215, -0.9999999
  %v232 = vmax.f32 %v216, -0.9999999
  %v233 = vmax.f32 %v217, -0.9999999
  %v234 = vmax.f32 %v218, -0.9999999
  %v235 = vmax.f32 %v219, -0.9999999
  %v236 = vmax.f32 %v220, -0.9999999
  %v237 = vmax.f32 %v221, -0.9999999
  %v238 = vmin.f32 %v222, 0.9999999
  %v239 = vmin.f32 %v223, 0.9999999
  %v240 = vmin.f32 %v224, 0.9999999
  %v241 = vmin.f32 %v225, 0.9999999
  %v242 = vmin.f32 %v226, 0.9999999
  %v243 = vmin.f32 %v227, 0.9999999
  %v244 = vmin.f32 %v228, 0.9999999
  %v245 = vmin.f32 %v229, 0.9999999
  %v246 = vmin.f32 %v230, 0.9999999
  %v247 = vmin.f32 %v231, 0.9999999
  %v248 = vmin.f32 %v232, 0.9999999
  %v249 = vmin.f32 %v233, 0.9999999
  %v250 = vmin.f32 %v234, 0.9999999
  %v251 = vmin.f32 %v235, 0.9999999
  %v252 = vmin.f32 %v236, 0.9999999
  %v253 = vmin.f32 %v237, 0.9999999
  %v254 = vadd.f32 %v238, 1.0
  %v255 = vadd.f32 %v239, 1.0
  %v256 = vadd.f32 %v240, 1.0
  %v257 = vadd.f32 %v241, 1.0
  %v258 = vadd.f32 %v242, 1.0
  %v259 = vadd.f32 %v243, 1.0
  %v260 = vadd.f32 %v244, 1.0
  %v261 = vadd.f32 %v245, 1.0
  %v262 = vadd.f32 %v246, 1.0
  %v263 = vadd.f32 %v247, 1.0
  %v264 = vadd.f32 %v248, 1.0
  %v265 = vadd.f32 %v249, 1.0
  %v266 = vadd.f32 %v250, 1.0
  %v267 = vadd.f32 %v251, 1.0
  %v268 = vadd.f32 %v252, 1.0
  %v269 = vadd.f32 %v253, 1.0
  %v270 = vsub.f32 1.0, %v238
  %v271 = vsub.f32 1.0, %v239
  %v272 = vsub.f32 1.0, %v240
  %v273 = vsub.f32 1.0, %v241
  %v274 = vsub.f32 1.0, %v242
  %v275 = vsub.f32 1.0, %v243
  %v276 = vsub.f32 1.0, %v244
  %v277 = vsub.f32 1.0, %v245
  %v278 = vsub.f32 1.0, %v246
  %v279 = vsub.f32 1.0, %v247
  %v280 = vsub.f32 1.0, %v248
  %v281 = vsub.f32 1.0, %v249
  %v282 = vsub.f32 1.0, %v250
  %v283 = vsub.f32 1.0, %v251
  %v284 = vsub.f32 1.0, %v252
  %v285 = vsub.f32 1.0, %v253
  %v286 = vrcp.pop %v270
  %v287 = vmul.f32 %v254, %v286
  %v288 = vrcp.pop %v271
  %v289 = vmul.f32 %v255, %v288
  %v290 = vrcp.pop %v272
  %v291 = vmul.f32 %v256, %v290
  %v292 = vrcp.pop %v273
  %v293 = vmul.f32 %v257, %v292
  %v294 = vrcp.pop %v274
  %v295 = vmul.f32 %v258, %v294
  %v296 = vrcp.pop %v275
  %v297 = vmul.f32 %v259, %v296
  %v298 = vrcp.pop %v276
  %v299 = vmul.f32 %v260, %v298
  %v300 = vrcp.pop %v277
  %v301 = vmul.f32 %v261, %v300
  %v302 = vrcp.pop %v278
  %v303 = vmul.f32 %v262, %v302
  %v304 = vrcp.pop %v279
  %v305 = vmul.f32 %v263, %v304
  %v306 = vrcp.pop %v280
  %v307 = vmul.f32 %v264, %v306
  %v308 = vrcp.pop %v281
  %v309 = vmul.f32 %v265, %v308
  %v310 = vrcp.pop %v282
  %v311 = vmul.f32 %v266, %v310
  %v312 = vrcp.pop %v283
  %v313 = vmul.f32 %v267, %v312
  %v314 = vrcp.pop %v284
  %v315 = vmul.f32 %v268, %v314
  %v316 = vrcp.pop %v285
  %v317 = vmul.f32 %v269, %v316
  %v318 = vlog2.pop %v287
  %v319 = vmul.f32 %v318, 0.6931472
  %v320 = vlog2.pop %v289
  %v321 = vmul.f32 %v320, 0.6931472
  %v322 = vlog2.pop %v291
  %v323 = vmul.f32 %v322, 0.6931472
  %v324 = vlog2.pop %v293
  %v325 = vmul.f32 %v324, 0.6931472
  %v326 = vlog2.pop %v295
  %v327 = vmul.f32 %v326, 0.6931472
  %v328 = vlog2.pop %v297
  %v329 = vmul.f32 %v328, 0.6931472
  %v330 = vlog2.pop %v299
  %v331 = vmul.f32 %v330, 0.6931472
  %v332 = vlog2.pop %v301
  %v333 = vmul.f32 %v332, 0.6931472
  %v334 = vlog2.pop %v303
  %v335 = vmul.f32 %v334, 0.6931472
  %v336 = vlog2.pop %v305
  %v337 = vmul.f32 %v336, 0.6931472
  %v338 = vlog2.pop %v307
  %v339 = vmul.f32 %v338, 0.6931472
  %v340 = vlog2.pop %v309
  %v341 = vmul.f32 %v340, 0.6931472
  %v342 = vlog2.pop %v311
  %v343 = vmul.f32 %v342, 0.6931472
  %v344 = vlog2.pop %v313
  %v345 = vmul.f32 %v344, 0.6931472
  %v346 = vlog2.pop %v315
  %v347 = vmul.f32 %v346, 0.6931472
  %v348 = vlog2.pop %v317
  %v349 = vmul.f32 %v348, 0.6931472
  %v350 = vmul.f32 %v319, 0.5
  %v351 = vmul.f32 %v321, 0.5
  %v352 = vmul.f32 %v323, 0.5
  %v353 = vmul.f32 %v325, 0.5
  %v354 = vmul.f32 %v327, 0.5
  %v355 = vmul.f32 %v329, 0.5
  %v356 = vmul.f32 %v331, 0.5
  %v357 = vmul.f32 %v333, 0.5
  %v358 = vmul.f32 %v335, 0.5
  %v359 = vmul.f32 %v337, 0.5
  %v360 = vmul.f32 %v339, 0.5
  %v361 = vmul.f32 %v341, 0.5
  %v362 = vmul.f32 %v343, 0.5
  %v363 = vmul.f32 %v345, 0.5
  %v364 = vmul.f32 %v347, 0.5
  %v365 = vmul.f32 %v349, 0.5
  %v366 = vrcp.pop %v206
  %v367 = vmul.f32 %v350, %v366
  %v368 = vrcp.pop %v207
  %v369 = vmul.f32 %v351, %v368
  %v370 = vrcp.pop %v208
  %v371 = vmul.f32 %v352, %v370
  %v372 = vrcp.pop %v209
  %v373 = vmul.f32 %v353, %v372
  %v374 = vrcp.pop %v210
  %v375 = vmul.f32 %v354, %v374
  %v376 = vrcp.pop %v211
  %v377 = vmul.f32 %v355, %v376
  %v378 = vrcp.pop %v212
  %v379 = vmul.f32 %v356, %v378
  %v380 = vrcp.pop %v213
  %v381 = vmul.f32 %v357, %v380
  %v382 = vrcp.pop %v214
  %v383 = vmul.f32 %v358, %v382
  %v384 = vrcp.pop %v215
  %v385 = vmul.f32 %v359, %v384
  %v386 = vrcp.pop %v216
  %v387 = vmul.f32 %v360, %v386
  %v388 = vrcp.pop %v217
  %v389 = vmul.f32 %v361, %v388
  %v390 = vrcp.pop %v218
  %v391 = vmul.f32 %v362, %v390
  %v392 = vrcp.pop %v219
  %v393 = vmul.f32 %v363, %v392
  %v394 = vrcp.pop %v220
  %v395 = vmul.f32 %v364, %v394
  %v396 = vrcp.pop %v221
  %v397 = vmul.f32 %v365, %v396
  %v398 = vmul.f32 %v367, %v13
  %v399 = vmul.f32 %v369, %v14
  %v400 = vmul.f32 %v371, %v15
  %v401 = vmul.f32 %v373, %v16
  %v402 = vmul.f32 %v375, %v17
  %v403 = vmul.f32 %v377, %v18
  %v404 = vmul.f32 %v379, %v19
  %v405 = vmul.f32 %v381, %v20
  %v406 = vmul.f32 %v383, %v21
  %v407 = vmul.f32 %v385, %v22
  %v408 = vmul.f32 %v387, %v23
  %v409 = vmul.f32 %v389, %v24
  %v410 = vmul.f32 %v391, %v25
  %v411 = vmul.f32 %v393, %v26
  %v412 = vmul.f32 %v395, %v27
  %v413 = vmul.f32 %v397, %v28
  %v414 = vld [vmem:[%s1] sm:$0xff]
  %v415 = vld [vmem:[%s1 + $0x8] sm:$0xff]
  %v416 = vld [vmem:[%s1 + $0x10] sm:$0xff]
  %v417 = vld [vmem:[%s1 + $0x18] sm:$0xff]
  %v419 = vsel %vm45, %v398, 0
  %v422 = vsel %vm45, %v399, 0
  %v425 = vsel %vm45, %v400, 0
  %v428 = vsel %vm45, %v401, 0
  %v431 = vsel %vm45, %v402, 0
  %v434 = vsel %vm45, %v403, 0
  %v437 = vsel %vm45, %v404, 0
  %v440 = vsel %vm45, %v405, 0
  %v443 = vsel %vm45, %v406, 0
  %v446 = vsel %vm45, %v407, 0
  %v449 = vsel %vm45, %v408, 0
  %v452 = vsel %vm45, %v409, 0
  %v455 = vsel %vm45, %v410, 0
  %v458 = vsel %vm45, %v411, 0
  %v461 = vsel %vm45, %v412, 0
  %v464 = vsel %vm45, %v413, 0
  %466 = vmatprep.subr.mxu0 0.0
  %467 = vmatpush1.msra.mxu0 0.0
  %468 = vmatprep.subr.mxu0 0.0
  %469 = vmatpush1.msra.mxu0 0.0
  %470 = vmatprep.subr.mxu0 0.0
  %471 = vmatpush1.msra.mxu0 0.0
  %472 = vmatprep.subr.mxu0 0.0
  %473 = vmatpush1.msra.mxu0 0.0
  %474 = vmatprep.subr.mxu0 0.0
  %475 = vmatpush1.msra.mxu0 0.0
  %476 = vmatprep.subr.mxu0 0.0
  %477 = vmatpush1.msra.mxu0 0.0
  %478 = vmatprep.subr.mxu0 0.0
  %479 = vmatpush1.msra.mxu0 0.0
  %480 = vmatprep.subr.mxu0 0.0
  %481 = vmatpush1.msra.mxu0 0.0
  %482 = vmatprep.subr.mxu0 0.0
  %483 = vmatpush1.msra.mxu0 0.0
  %484 = vmatprep.subr.mxu0 0.0
  %485 = vmatpush1.msra.mxu0 0.0
  %486 = vmatprep.subr.mxu0 0.0
  %487 = vmatpush1.msra.mxu0 0.0
  %488 = vmatprep.subr.mxu0 0.0
  %489 = vmatpush1.msra.mxu0 0.0
  %490 = vmatprep.subr.mxu0 0.0
  %491 = vmatpush1.msra.mxu0 %v417
  %492 = vmatprep.subr.mxu0 0.0
  %493 = vmatpush1.msra.mxu0 %v416
  %494 = vmatprep.subr.mxu0 0.0
  %495 = vmatpush1.msra.mxu0 %v415
  %496 = vmatprep.subr.mxu0 0.0
  %497 = vmatpush1.msra.mxu0 %v414
  %498 = vmatprep.subr.mxu0 0.0
  %499 = vmatpush2.msra.mxu0 0.0
  %500 = vmatprep.subr.mxu0 0.0
  %501 = vmatpush2.msra.mxu0 0.0
  %502 = vmatprep.subr.mxu0 0.0
  %503 = vmatpush2.msra.mxu0 0.0
  %504 = vmatprep.subr.mxu0 0.0
  %505 = vmatpush2.msra.mxu0 0.0
  %506 = vmatprep.subr.mxu0 0.0
  %507 = vmatpush2.msra.mxu0 0.0
  %508 = vmatprep.subr.mxu0 0.0
  %509 = vmatpush2.msra.mxu0 0.0
  %510 = vmatprep.subr.mxu0 0.0
  %511 = vmatpush2.msra.mxu0 0.0
  %512 = vmatprep.subr.mxu0 0.0
  %513 = vmatpush2.msra.mxu0 0.0
  %514 = vmatprep.subr.mxu0 0.0
  %515 = vmatpush2.msra.mxu0 0.0
  %516 = vmatprep.subr.mxu0 0.0
  %517 = vmatpush2.msra.mxu0 0.0
  %518 = vmatprep.subr.mxu0 0.0
  %519 = vmatpush2.msra.mxu0 0.0
  %520 = vmatprep.subr.mxu0 0.0
  %521 = vmatpush2.msra.mxu0 0.0
  %522 = vmatprep.subr.mxu0 0.0
  %523 = vmatpush2.msra.mxu0 0.0
  %524 = vmatprep.subr.mxu0 0.0
  %525 = vmatpush2.msra.mxu0 0.0
  %526 = vmatprep.subr.mxu0 0.0
  %527 = vmatpush2.msra.mxu0 0.0
  %528 = vmatprep.subr.mxu0 0.0
  %529 = vmatpush2.msra.mxu0 0.0
  %530 = vmatprep.mubr.f32.mxu0 0.0
  %531 = vmatmul.mubr.f32.gmra.mxu0 %v419
  %v532 = vpop.f32.mrf.mxu0
  %v533 = vadd.f32 0.0, %v532
  %v534 = vpop.f32.mrf.mxu0
  %535 = vmatprep.mubr.f32.mxu0 0.0
  %536 = vmatmul.mubr.f32.gmra.mxu0 %v422
  %v537 = vpop.f32.mrf.mxu0
  %v538 = vadd.f32 0.0, %v537
  %v539 = vpop.f32.mrf.mxu0
  %540 = vmatprep.mubr.f32.mxu0 0.0
  %541 = vmatmul.mubr.f32.gmra.mxu0 %v425
  %v542 = vpop.f32.mrf.mxu0
  %v543 = vadd.f32 0.0, %v542
  %v544 = vpop.f32.mrf.mxu0
  %545 = vmatprep.mubr.f32.mxu0 0.0
  %546 = vmatmul.mubr.f32.gmra.mxu0 %v428
  %v547 = vpop.f32.mrf.mxu0
  %v548 = vadd.f32 0.0, %v547
  %v549 = vpop.f32.mrf.mxu0
  %550 = vmatprep.mubr.f32.mxu0 0.0
  %551 = vmatmul.mubr.f32.gmra.mxu0 %v431
  %v552 = vpop.f32.mrf.mxu0
  %v553 = vadd.f32 0.0, %v552
  %v554 = vpop.f32.mrf.mxu0
  %555 = vmatprep.mubr.f32.mxu0 0.0
  %556 = vmatmul.mubr.f32.gmra.mxu0 %v434
  %v557 = vpop.f32.mrf.mxu0
  %v558 = vadd.f32 0.0, %v557
  %v559 = vpop.f32.mrf.mxu0
  %560 = vmatprep.mubr.f32.mxu0 0.0
  %561 = vmatmul.mubr.f32.gmra.mxu0 %v437
  %v562 = vpop.f32.mrf.mxu0
  %v563 = vadd.f32 0.0, %v562
  %v564 = vpop.f32.mrf.mxu0
  %565 = vmatprep.mubr.f32.mxu0 0.0
  %566 = vmatmul.mubr.f32.gmra.mxu0 %v440
  %v567 = vpop.f32.mrf.mxu0
  %v568 = vadd.f32 0.0, %v567
  %v569 = vpop.f32.mrf.mxu0
  %570 = vmatprep.mubr.f32.mxu0 0.0
  %571 = vmatmul.mubr.f32.gmra.mxu0 %v443
  %v572 = vpop.f32.mrf.mxu0
  %v573 = vadd.f32 0.0, %v572
  %v574 = vpop.f32.mrf.mxu0
  %575 = vmatprep.mubr.f32.mxu0 0.0
  %576 = vmatmul.mubr.f32.gmra.mxu0 %v446
  %v577 = vpop.f32.mrf.mxu0
  %v578 = vadd.f32 0.0, %v577
  %v579 = vpop.f32.mrf.mxu0
  %580 = vmatprep.mubr.f32.mxu0 0.0
  %581 = vmatmul.mubr.f32.gmra.mxu0 %v449
  %v582 = vpop.f32.mrf.mxu0
  %v583 = vadd.f32 0.0, %v582
  %v584 = vpop.f32.mrf.mxu0
  %585 = vmatprep.mubr.f32.mxu0 0.0
  %586 = vmatmul.mubr.f32.gmra.mxu0 %v452
  %v587 = vpop.f32.mrf.mxu0
  %v588 = vadd.f32 0.0, %v587
  %v589 = vpop.f32.mrf.mxu0
  %590 = vmatprep.mubr.f32.mxu0 0.0
  %591 = vmatmul.mubr.f32.gmra.mxu0 %v455
  %v592 = vpop.f32.mrf.mxu0
  %v593 = vadd.f32 0.0, %v592
  %v594 = vpop.f32.mrf.mxu0
  %595 = vmatprep.mubr.f32.mxu0 0.0
  %596 = vmatmul.mubr.f32.gmra.mxu0 %v458
  %v597 = vpop.f32.mrf.mxu0
  %v598 = vadd.f32 0.0, %v597
  %v599 = vpop.f32.mrf.mxu0
  %600 = vmatprep.mubr.f32.mxu0 0.0
  %601 = vmatmul.mubr.f32.gmra.mxu0 %v461
  %v602 = vpop.f32.mrf.mxu0
  %v603 = vadd.f32 0.0, %v602
  %v604 = vpop.f32.mrf.mxu0
  %605 = vmatprep.mubr.f32.mxu0 0.0
  %606 = vmatmul.mubr.f32.gmra.mxu0 %v464
  %v607 = vpop.f32.mrf.mxu0
  %v608 = vadd.f32 0.0, %v607
  %v609 = vpop.f32.mrf.mxu0
  %610 = vdwg.mxu0
  %627 = vrot.lane.b32.xlu0 %v533, 1
  %v628 = vpop.permute.xlu0 %627
  %629 = vrot.lane.b32.xlu0 %v538, 1
  %v630 = vpop.permute.xlu0 %629
  %631 = vrot.lane.b32.xlu0 %v543, 1
  %v632 = vpop.permute.xlu0 %631
  %633 = vrot.lane.b32.xlu0 %v548, 1
  %v634 = vpop.permute.xlu0 %633
  %635 = vrot.lane.b32.xlu0 %v553, 1
  %v636 = vpop.permute.xlu0 %635
  %637 = vrot.lane.b32.xlu0 %v558, 1
  %v638 = vpop.permute.xlu0 %637
  %639 = vrot.lane.b32.xlu0 %v563, 1
  %v640 = vpop.permute.xlu0 %639
  %641 = vrot.lane.b32.xlu0 %v568, 1
  %v642 = vpop.permute.xlu0 %641
  %643 = vrot.lane.b32.xlu0 %v573, 1
  %v644 = vpop.permute.xlu0 %643
  %645 = vrot.lane.b32.xlu0 %v578, 1
  %v646 = vpop.permute.xlu0 %645
  %647 = vrot.lane.b32.xlu0 %v583, 1
  %v648 = vpop.permute.xlu0 %647
  %649 = vrot.lane.b32.xlu0 %v588, 1
  %v650 = vpop.permute.xlu0 %649
  %651 = vrot.lane.b32.xlu0 %v593, 1
  %v652 = vpop.permute.xlu0 %651
  %653 = vrot.lane.b32.xlu0 %v598, 1
  %v654 = vpop.permute.xlu0 %653
  %655 = vrot.lane.b32.xlu0 %v603, 1
  %v656 = vpop.permute.xlu0 %655
  %657 = vrot.lane.b32.xlu0 %v608, 1
  %v658 = vpop.permute.xlu0 %657
  %vm675 = vcmask 130048
  %v676 = vsel %vm675, %v533, 1.0
  %v677 = vsel %vm675, %v538, 1.0
  %v678 = vsel %vm675, %v543, 1.0
  %v679 = vsel %vm675, %v548, 1.0
  %v680 = vsel %vm675, %v553, 1.0
  %v681 = vsel %vm675, %v558, 1.0
  %v682 = vsel %vm675, %v563, 1.0
  %v683 = vsel %vm675, %v568, 1.0
  %v684 = vsel %vm675, %v573, 1.0
  %v685 = vsel %vm675, %v578, 1.0
  %v686 = vsel %vm675, %v583, 1.0
  %v687 = vsel %vm675, %v588, 1.0
  %v688 = vsel %vm675, %v593, 1.0
  %v689 = vsel %vm675, %v598, 1.0
  %v690 = vsel %vm675, %v603, 1.0
  %v691 = vsel %vm675, %v608, 1.0
  %vm692 = vcmask 138240
  %v693 = vsel %vm692, %v676, %v628
  %v694 = vsel %vm692, %v677, %v630
  %v695 = vsel %vm692, %v678, %v632
  %v696 = vsel %vm692, %v679, %v634
  %v697 = vsel %vm692, %v680, %v636
  %v698 = vsel %vm692, %v681, %v638
  %v699 = vsel %vm692, %v682, %v640
  %v700 = vsel %vm692, %v683, %v642
  %v701 = vsel %vm692, %v684, %v644
  %v702 = vsel %vm692, %v685, %v646
  %v703 = vsel %vm692, %v686, %v648
  %v704 = vsel %vm692, %v687, %v650
  %v705 = vsel %vm692, %v688, %v652
  %v706 = vsel %vm692, %v689, %v654
  %v707 = vsel %vm692, %v690, %v656
  %v708 = vsel %vm692, %v691, %v658
  %vm709 = vcmask 269312
  %v710 = vsel %vm709, %v693, 1.0
  %v711 = vsel %vm709, %v694, 1.0
  %v712 = vsel %vm709, %v695, 1.0
  %v713 = vsel %vm709, %v696, 1.0
  %v714 = vsel %vm709, %v697, 1.0
  %v715 = vsel %vm709, %v698, 1.0
  %v716 = vsel %vm709, %v699, 1.0
  %v717 = vsel %vm709, %v700, 1.0
  %v718 = vsel %vm709, %v701, 1.0
  %v719 = vsel %vm709, %v702, 1.0
  %v720 = vsel %vm709, %v703, 1.0
  %v721 = vsel %vm709, %v704, 1.0
  %v722 = vsel %vm709, %v705, 1.0
  %v723 = vsel %vm709, %v706, 1.0
  %v724 = vsel %vm709, %v707, 1.0
  %v725 = vsel %vm709, %v708, 1.0
  %v726 = vpack.c.bf16 %v711, %v710
  %v727 = vpack.c.bf16 %v713, %v712
  %v728 = vpack.c.bf16 %v715, %v714
  %v729 = vpack.c.bf16 %v717, %v716
  %v730 = vpack.c.bf16 %v719, %v718
  %v731 = vpack.c.bf16 %v721, %v720
  %v732 = vpack.c.bf16 %v723, %v722
  %v733 = vpack.c.bf16 %v725, %v724
  %v742 = vunpack.c.l.b16 %v726
  %v743 = vunpack.c.h.b16 %v726
  %v744 = vunpack.c.l.b16 %v727
  %v745 = vunpack.c.h.b16 %v727
  %v746 = vunpack.c.l.b16 %v728
  %v747 = vunpack.c.h.b16 %v728
  %v748 = vunpack.c.l.b16 %v729
  %v749 = vunpack.c.h.b16 %v729
  %v750 = vunpack.c.l.b16 %v730
  %v751 = vunpack.c.h.b16 %v730
  %v752 = vunpack.c.l.b16 %v731
  %v753 = vunpack.c.h.b16 %v731
  %v754 = vunpack.c.l.b16 %v732
  %v755 = vunpack.c.h.b16 %v732
  %v756 = vunpack.c.l.b16 %v733
  %v757 = vunpack.c.h.b16 %v733
  %v758 = vpack.c.b16 %v742, %v742
  %v759 = vpack.c.b16 %v743, %v743
  %v760 = vpack.c.b16 %v744, %v744
  %v761 = vpack.c.b16 %v745, %v745
  %v762 = vpack.c.b16 %v746, %v746
  %v763 = vpack.c.b16 %v747, %v747
  %v764 = vpack.c.b16 %v748, %v748
  %v765 = vpack.c.b16 %v749, %v749
  %v766 = vpack.c.b16 %v750, %v750
  %v767 = vpack.c.b16 %v751, %v751
  %v768 = vpack.c.b16 %v752, %v752
  %v769 = vpack.c.b16 %v753, %v753
  %v770 = vpack.c.b16 %v754, %v754
  %v771 = vpack.c.b16 %v755, %v755
  %v772 = vpack.c.b16 %v756, %v756
  %v773 = vpack.c.b16 %v757, %v757
  %vm790 = vcmask 273408
  %791 = vst.msk [vmem:[%s2] sm:$0xf] %vm790, %v758
  %792 = vst.msk [vmem:[%s2 + $0x4] sm:$0xf] %vm790, %v759
  %793 = vst.msk [vmem:[%s2 + $0x8] sm:$0xf] %vm790, %v760
  %794 = vst.msk [vmem:[%s2 + $0xc] sm:$0xf] %vm790, %v761
  %795 = vst.msk [vmem:[%s2 + $0x10] sm:$0xf] %vm790, %v762
  %796 = vst.msk [vmem:[%s2 + $0x14] sm:$0xf] %vm790, %v763
  %797 = vst.msk [vmem:[%s2 + $0x18] sm:$0xf] %vm790, %v764
  %798 = vst.msk [vmem:[%s2 + $0x1c] sm:$0xf] %vm790, %v765
  %799 = vst.msk [vmem:[%s2 + $0x20] sm:$0xf] %vm790, %v766
  %800 = vst.msk [vmem:[%s2 + $0x24] sm:$0xf] %vm790, %v767
  %801 = vst.msk [vmem:[%s2 + $0x28] sm:$0xf] %vm790, %v768
  %802 = vst.msk [vmem:[%s2 + $0x2c] sm:$0xf] %vm790, %v769
  %803 = vst.msk [vmem:[%s2 + $0x30] sm:$0xf] %vm790, %v770
  %804 = vst.msk [vmem:[%s2 + $0x34] sm:$0xf] %vm790, %v771
  %805 = vst.msk [vmem:[%s2 + $0x38] sm:$0xf] %vm790, %v772
  %806 = vst.msk [vmem:[%s2 + $0x3c] sm:$0xf] %vm790, %v773
  %807 = vrot.lane.b32.xlu0 %v533, 96
  %v808 = vpop.permute.xlu0 %807
  %809 = vrot.lane.b32.xlu0 %v538, 96
  %v810 = vpop.permute.xlu0 %809
  %811 = vrot.lane.b32.xlu0 %v543, 96
  %v812 = vpop.permute.xlu0 %811
  %813 = vrot.lane.b32.xlu0 %v548, 96
  %v814 = vpop.permute.xlu0 %813
  %815 = vrot.lane.b32.xlu0 %v553, 96
  %v816 = vpop.permute.xlu0 %815
  %817 = vrot.lane.b32.xlu0 %v558, 96
  %v818 = vpop.permute.xlu0 %817
  %819 = vrot.lane.b32.xlu0 %v563, 96
  %v820 = vpop.permute.xlu0 %819
  %821 = vrot.lane.b32.xlu0 %v568, 96
  %v822 = vpop.permute.xlu0 %821
  %823 = vrot.lane.b32.xlu0 %v573, 96
  %v824 = vpop.permute.xlu0 %823
  %825 = vrot.lane.b32.xlu0 %v578, 96
  %v826 = vpop.permute.xlu0 %825
  %827 = vrot.lane.b32.xlu0 %v583, 96
  %v828 = vpop.permute.xlu0 %827
  %829 = vrot.lane.b32.xlu0 %v588, 96
  %v830 = vpop.permute.xlu0 %829
  %831 = vrot.lane.b32.xlu0 %v593, 96
  %v832 = vpop.permute.xlu0 %831
  %833 = vrot.lane.b32.xlu0 %v598, 96
  %v834 = vpop.permute.xlu0 %833
  %835 = vrot.lane.b32.xlu0 %v603, 96
  %v836 = vpop.permute.xlu0 %835
  %837 = vrot.lane.b32.xlu0 %v608, 96
  %v838 = vpop.permute.xlu0 %837
  %vm855 = vcmask 31744
  %856 = vst.msk [vmem:[%s3] sm:$0xff] %vm855, %v808
  %857 = vst.msk [vmem:[%s3 + $0x8] sm:$0xff] %vm855, %v810
  %858 = vst.msk [vmem:[%s3 + $0x10] sm:$0xff] %vm855, %v812
  %859 = vst.msk [vmem:[%s3 + $0x18] sm:$0xff] %vm855, %v814
  %860 = vst.msk [vmem:[%s3 + $0x20] sm:$0xff] %vm855, %v816
  %861 = vst.msk [vmem:[%s3 + $0x28] sm:$0xff] %vm855, %v818
  %862 = vst.msk [vmem:[%s3 + $0x30] sm:$0xff] %vm855, %v820
  %863 = vst.msk [vmem:[%s3 + $0x38] sm:$0xff] %vm855, %v822
  %864 = vst.msk [vmem:[%s3 + $0x40] sm:$0xff] %vm855, %v824
  %865 = vst.msk [vmem:[%s3 + $0x48] sm:$0xff] %vm855, %v826
  %866 = vst.msk [vmem:[%s3 + $0x50] sm:$0xff] %vm855, %v828
  %867 = vst.msk [vmem:[%s3 + $0x58] sm:$0xff] %vm855, %v830
  %868 = vst.msk [vmem:[%s3 + $0x60] sm:$0xff] %vm855, %v832
  %869 = vst.msk [vmem:[%s3 + $0x68] sm:$0xff] %vm855, %v834
  %870 = vst.msk [vmem:[%s3 + $0x70] sm:$0xff] %vm855, %v836
  %871 = vst.msk [vmem:[%s3 + $0x78] sm:$0xff] %vm855, %v838
  // Predicated region
  $region10: #{tpu_custom_call.1} parent=0 // pred_check
    _
  $region11: #{tpu_custom_call.1} parent=0 // pred_check_branch
    %873 = sbr.rel (0) target = $region13
  $region12: #{tpu_custom_call.1} parent=0 // pred_region
    _
  $region13: #{tpu_custom_call.1} parent=0 // pred_fallthru
    _
  // Predicated region
  $region14: #{tpu_custom_call.1} parent=0 // pred_check
    _
  $region15: #{tpu_custom_call.1} parent=0 // pred_check_branch
    %875 = sbr.rel (0) target = $region17
  $region16: #{tpu_custom_call.1} parent=0 // pred_region
    _
  $region17: #{tpu_custom_call.1} parent=0 // pred_fallthru
    _
  // Predicated region
  $region18: #{tpu_custom_call.1} parent=0 // pred_check
    _
  $region19: #{tpu_custom_call.1} parent=0 // pred_check_branch
    %877 = sbr.rel (0) target = $region21
  $region20: #{tpu_custom_call.1} parent=0 // pred_region
    _
  $region21: #{tpu_custom_call.1} parent=0 // pred_fallthru
    _
  // Predicated region
  $region22: #{tpu_custom_call.1} parent=0 // pred_check
    _
  $region23: #{tpu_custom_call.1} parent=0 // pred_check_branch
    %879 = sbr.rel (0) target = $region25
  $region24: #{tpu_custom_call.1} parent=0 // pred_region
    _
  $region25: #{tpu_custom_call.1} parent=0 // pred_fallthru
    _

</llo_original>
